<compile_context>
chip_gen: v6e
topology: v6e:2x2x1
jax: 0.10.0
libtpu: 0.0.40
codegen_flags: <defaults>
</compile_context>

<pallas_src>
import jax
import jax.numpy as jnp
from jax.experimental import pallas as pl
from jax.experimental.pallas import tpu as pltpu


def _round_up(x, m):
    return ((x + m - 1) // m) * m


def critic_kernel(obs_ref, act_ref,
                  w1o_ref, w1a_ref, b1_ref,
                  w2_ref, b2_ref,
                  w3_ref, b3_ref,
                  q_ref):
    # First layer: torch.cat([obs, action], -1) @ W1.T + b1  ==
    #   obs @ w1_obs + act @ w1_act + b1   (no lane-axis concat needed).
    h = (jnp.dot(obs_ref[...], w1o_ref[...], preferred_element_type=jnp.float32)
         + jnp.dot(act_ref[...], w1a_ref[...], preferred_element_type=jnp.float32)
         + b1_ref[...])
    h = jnp.maximum(h, 0.0)

    # Hidden layer (hidden_depth = 2 -> one extra Linear/ReLU).
    h = jnp.dot(h, w2_ref[...], preferred_element_type=jnp.float32) + b2_ref[...]
    h = jnp.maximum(h, 0.0)

    # Output layer: Linear(hidden, 1) -> Q value.
    q = jnp.dot(h, w3_ref[...], preferred_element_type=jnp.float32) + b3_ref[...]
    q_ref[...] = q.astype(q_ref.dtype)


def single_q_critic(obs, action, params, *, block_b=512):
    """obs: (B, obs_dim) f32, action: (B, action_dim) f32 -> q: (B, 1) f32."""
    assert obs.shape[0] == action.shape[0]
    B, obs_dim = obs.shape
    action_dim = action.shape[1]
    w1_obs, w1_act, b1, w2, b2, w3, b3 = params
    H = w1_obs.shape[1]

    # Batch tile: at least 8 (sublane granularity), at most block_b.
    TB = min(block_b, _round_up(B, 8))
    Bp = _round_up(B, TB)
    if Bp != B:
        pad = Bp - B
        obs = jnp.pad(obs, ((0, pad), (0, 0)))
        action = jnp.pad(action, ((0, pad), (0, 0)))

    grid = (Bp // TB,)

    # Batched operands: tiled along the batch axis.
    obs_spec = pl.BlockSpec((TB, obs_dim), lambda i: (i, 0))
    act_spec = pl.BlockSpec((TB, action_dim), lambda i: (i, 0))
    q_spec = pl.BlockSpec((TB, 1), lambda i: (i, 0))

    # Weights / biases: same block every step -> stay resident in VMEM.
    def resident(shape):
        return pl.BlockSpec(shape, lambda i: (0, 0))

    q = pl.pallas_call(
        critic_kernel,
        out_shape=jax.ShapeDtypeStruct((Bp, 1), jnp.float32),
        grid=grid,
        in_specs=[
            obs_spec,
            act_spec,
            resident((obs_dim, H)),      # w1_obs
            resident((action_dim, H)),   # w1_act
            resident((1, H)),            # b1
            resident((H, H)),            # w2
            resident((1, H)),            # b2
            resident((H, 1)),            # w3
            resident((1, 1)),            # b3
        ],
        out_specs=q_spec,
        compiler_params=pltpu.CompilerParams(
            dimension_semantics=("parallel",)),
    )(obs, action, w1_obs, w1_act, b1, w2, b2, w3, b3)

    return q[:B]


def init_params(key, obs_dim, action_dim, hidden_dim):
    """Matches orthogonal_init_: orthogonal weights, zero biases.
    Weights stored as (in, out) so the kernel computes x @ W (== torch x @ W.T).
    w1 is initialized over the full concat input then split into obs/act parts
    so the math is identical to the concat formulation."""
    k1, k2, k3 = jax.random.split(key, 3)
    ortho = jax.nn.initializers.orthogonal()
    in_dim = obs_dim + action_dim
    w1 = ortho(k1, (in_dim, hidden_dim), jnp.float32)
    w1_obs = w1[:obs_dim]
    w1_act = w1[obs_dim:]
    b1 = jnp.zeros((1, hidden_dim), jnp.float32)
    w2 = ortho(k2, (hidden_dim, hidden_dim), jnp.float32)
    b2 = jnp.zeros((1, hidden_dim), jnp.float32)
    w3 = ortho(k3, (hidden_dim, 1), jnp.float32)
    b3 = jnp.zeros((1, 1), jnp.float32)
    return (w1_obs, w1_act, b1, w2, b2, w3, b3)


def reference_forward(obs, action, params):
    """Pure-JAX reference of SingleQCritic.forward for verification."""
    w1_obs, w1_act, b1, w2, b2, w3, b3 = params
    w1 = jnp.concatenate([w1_obs, w1_act], axis=0)
    x = jnp.concatenate([obs, action], axis=-1)
    h = jnp.maximum(x @ w1 + b1, 0.0)
    h = jnp.maximum(h @ w2 + b2, 0.0)
    return h @ w3 + b3


if __name__ == "__main__":
    # Small shapes consistent with the module: args.hidden_dim=32, hidden_depth=2.
    B, obs_dim, action_dim, hidden_dim = 8, 24, 8, 32

    key = jax.random.PRNGKey(0)
    k_obs, k_act, k_par = jax.random.split(key, 3)
    obs = jax.random.normal(k_obs, (B, obs_dim), jnp.float32)
    action = jax.random.normal(k_act, (B, action_dim), jnp.float32)
    params = init_params(k_par, obs_dim, action_dim, hidden_dim)

    q = single_q_critic(obs, action, params)
    q = jax.block_until_ready(q)

    q_ref = reference_forward(obs, action, params)
    assert q.shape == (B, 1)
    assert jnp.allclose(q, q_ref, atol=1e-5, rtol=1e-5)

    print("KERNEL_OK")
</pallas_src>

<mosaic_0001>
module attributes {stable_mosaic.version = 11 : i64} {
  func.func @critic_kernel(%arg0: i32, %arg1: memref<8x24xf32, #tpu.memory_space<vmem>>, %arg2: memref<8x8xf32, #tpu.memory_space<vmem>>, %arg3: memref<24x32xf32, #tpu.memory_space<vmem>>, %arg4: memref<8x32xf32, #tpu.memory_space<vmem>>, %arg5: memref<1x32xf32, #tpu.memory_space<vmem>>, %arg6: memref<32x32xf32, #tpu.memory_space<vmem>>, %arg7: memref<1x32xf32, #tpu.memory_space<vmem>>, %arg8: memref<32x1xf32, #tpu.memory_space<vmem>>, %arg9: memref<1x1xf32, #tpu.memory_space<vmem>>, %arg10: memref<8x1xf32, #tpu.memory_space<vmem>>) attributes {dimension_semantics = [#tpu.dimension_semantics<parallel>], iteration_bounds = array<i64: 1>, scalar_prefetch = 0 : i64, scratch_operands = 0 : i64, tpu.core_type = #tpu.core_type<tc>, window_params = [{transform_indices = @transform_0, window_bounds = array<i64: 8, 24>}, {transform_indices = @transform_1, window_bounds = array<i64: 8, 8>}, {pipeline_mode = #tpu.pipeline_mode<synchronous>, transform_indices = @transform_2, window_bounds = array<i64: 24, 32>}, {pipeline_mode = #tpu.pipeline_mode<synchronous>, transform_indices = @transform_3, window_bounds = array<i64: 8, 32>}, {pipeline_mode = #tpu.pipeline_mode<synchronous>, transform_indices = @transform_4, window_bounds = array<i64: 1, 32>}, {pipeline_mode = #tpu.pipeline_mode<synchronous>, transform_indices = @transform_5, window_bounds = array<i64: 32, 32>}, {pipeline_mode = #tpu.pipeline_mode<synchronous>, transform_indices = @transform_6, window_bounds = array<i64: 1, 32>}, {pipeline_mode = #tpu.pipeline_mode<synchronous>, transform_indices = @transform_7, window_bounds = array<i64: 32, 1>}, {pipeline_mode = #tpu.pipeline_mode<synchronous>, transform_indices = @transform_8, window_bounds = array<i64: 1, 1>}, {transform_indices = @transform_9, window_bounds = array<i64: 8, 1>}]} {
    %c0 = arith.constant 0 : index
    %c0_0 = arith.constant 0 : index
    %0 = vector.load %arg1[%c0, %c0_0] : memref<8x24xf32, #tpu.memory_space<vmem>>, vector<8x24xf32>
    %c0_1 = arith.constant 0 : index
    %c0_2 = arith.constant 0 : index
    %1 = vector.load %arg3[%c0_1, %c0_2] : memref<24x32xf32, #tpu.memory_space<vmem>>, vector<24x32xf32>
    %cst = arith.constant dense<0.000000e+00> : vector<8x32xf32>
    %2 = tpu.matmul %0, %1, %cst {dimension_numbers = #tpu.dot_dimension_numbers<[1], [0], [0], [1], [0, 0, 1, 1], [], []>} : vector<8x24xf32>, vector<24x32xf32>, vector<8x32xf32> -> vector<8x32xf32>
    %c0_3 = arith.constant 0 : index
    %c0_4 = arith.constant 0 : index
    %3 = vector.load %arg2[%c0_3, %c0_4] : memref<8x8xf32, #tpu.memory_space<vmem>>, vector<8x8xf32>
    %c0_5 = arith.constant 0 : index
    %c0_6 = arith.constant 0 : index
    %4 = vector.load %arg4[%c0_5, %c0_6] : memref<8x32xf32, #tpu.memory_space<vmem>>, vector<8x32xf32>
    %cst_7 = arith.constant dense<0.000000e+00> : vector<8x32xf32>
    %5 = tpu.matmul %3, %4, %cst_7 {dimension_numbers = #tpu.dot_dimension_numbers<[1], [0], [0], [1], [0, 0, 1, 1], [], []>} : vector<8x8xf32>, vector<8x32xf32>, vector<8x32xf32> -> vector<8x32xf32>
    %6 = arith.addf %2, %5 : vector<8x32xf32>
    %c0_8 = arith.constant 0 : index
    %c0_9 = arith.constant 0 : index
    %7 = vector.load %arg5[%c0_8, %c0_9] : memref<1x32xf32, #tpu.memory_space<vmem>>, vector<1x32xf32>
    %8 = vector.broadcast %7 : vector<1x32xf32> to vector<8x32xf32>
    %9 = arith.addf %6, %8 : vector<8x32xf32>
    %cst_10 = arith.constant 0.000000e+00 : f32
    %10 = vector.broadcast %cst_10 : f32 to vector<8x32xf32>
    %11 = arith.maximumf %9, %10 : vector<8x32xf32>
    %c0_11 = arith.constant 0 : index
    %c0_12 = arith.constant 0 : index
    %12 = vector.load %arg6[%c0_11, %c0_12] : memref<32x32xf32, #tpu.memory_space<vmem>>, vector<32x32xf32>
    %cst_13 = arith.constant dense<0.000000e+00> : vector<8x32xf32>
    %13 = tpu.matmul %11, %12, %cst_13 {dimension_numbers = #tpu.dot_dimension_numbers<[1], [0], [0], [1], [0, 0, 1, 1], [], []>} : vector<8x32xf32>, vector<32x32xf32>, vector<8x32xf32> -> vector<8x32xf32>
    %c0_14 = arith.constant 0 : index
    %c0_15 = arith.constant 0 : index
    %14 = vector.load %arg7[%c0_14, %c0_15] : memref<1x32xf32, #tpu.memory_space<vmem>>, vector<1x32xf32>
    %15 = vector.broadcast %14 : vector<1x32xf32> to vector<8x32xf32>
    %16 = arith.addf %13, %15 : vector<8x32xf32>
    %cst_16 = arith.constant 0.000000e+00 : f32
    %17 = vector.broadcast %cst_16 : f32 to vector<8x32xf32>
    %18 = arith.maximumf %16, %17 : vector<8x32xf32>
    %c0_17 = arith.constant 0 : index
    %c0_18 = arith.constant 0 : index
    %19 = vector.load %arg8[%c0_17, %c0_18] : memref<32x1xf32, #tpu.memory_space<vmem>>, vector<32x1xf32>
    %cst_19 = arith.constant dense<0.000000e+00> : vector<8x1xf32>
    %20 = tpu.matmul %18, %19, %cst_19 {dimension_numbers = #tpu.dot_dimension_numbers<[1], [0], [0], [1], [0, 0, 1, 1], [], []>} : vector<8x32xf32>, vector<32x1xf32>, vector<8x1xf32> -> vector<8x1xf32>
    %c0_20 = arith.constant 0 : index
    %c0_21 = arith.constant 0 : index
    %21 = vector.load %arg9[%c0_20, %c0_21] : memref<1x1xf32, #tpu.memory_space<vmem>>, vector<1x1xf32>
    %22 = vector.broadcast %21 : vector<1x1xf32> to vector<8x1xf32>
    %23 = arith.addf %20, %22 : vector<8x1xf32>
    %c0_22 = arith.constant 0 : index
    %c0_23 = arith.constant 0 : index
    %24 = vector.load %arg10[%c0_22, %c0_23] : memref<8x1xf32, #tpu.memory_space<vmem>>, vector<8x1xf32>
    tpu.vector_store %arg10[%c0_22, %c0_23], %23 {strides = array<i32>} : memref<8x1xf32, #tpu.memory_space<vmem>>, vector<8x1xf32>,
    return
  }
  func.func @transform_0(%arg0: i32) -> (i32, i32) {
    %c0_i32 = arith.constant 0 : i32
    %c0_i32_0 = arith.constant 0 : i32
    return %arg0, %c0_i32 : i32, i32
  }
  func.func @transform_1(%arg0: i32) -> (i32, i32) {
    %c0_i32 = arith.constant 0 : i32
    %c0_i32_0 = arith.constant 0 : i32
    return %arg0, %c0_i32 : i32, i32
  }
  func.func @transform_2(%arg0: i32) -> (i32, i32) {
    %c0_i32 = arith.constant 0 : i32
    %c0_i32_0 = arith.constant 0 : i32
    %c0_i32_1 = arith.constant 0 : i32
    return %c0_i32, %c0_i32_0 : i32, i32
  }
  func.func @transform_3(%arg0: i32) -> (i32, i32) {
    %c0_i32 = arith.constant 0 : i32
    %c0_i32_0 = arith.constant 0 : i32
    %c0_i32_1 = arith.constant 0 : i32
    return %c0_i32, %c0_i32_0 : i32, i32
  }
  func.func @transform_4(%arg0: i32) -> (i32, i32) {
    %c0_i32 = arith.constant 0 : i32
    %c0_i32_0 = arith.constant 0 : i32
    %c0_i32_1 = arith.constant 0 : i32
    return %c0_i32, %c0_i32_0 : i32, i32
  }
  func.func @transform_5(%arg0: i32) -> (i32, i32) {
    %c0_i32 = arith.constant 0 : i32
    %c0_i32_0 = arith.constant 0 : i32
    %c0_i32_1 = arith.constant 0 : i32
    return %c0_i32, %c0_i32_0 : i32, i32
  }
  func.func @transform_6(%arg0: i32) -> (i32, i32) {
    %c0_i32 = arith.constant 0 : i32
    %c0_i32_0 = arith.constant 0 : i32
    %c0_i32_1 = arith.constant 0 : i32
    return %c0_i32, %c0_i32_0 : i32, i32
  }
  func.func @transform_7(%arg0: i32) -> (i32, i32) {
    %c0_i32 = arith.constant 0 : i32
    %c0_i32_0 = arith.constant 0 : i32
    %c0_i32_1 = arith.constant 0 : i32
    return %c0_i32, %c0_i32_0 : i32, i32
  }
  func.func @transform_8(%arg0: i32) -> (i32, i32) {
    %c0_i32 = arith.constant 0 : i32
    %c0_i32_0 = arith.constant 0 : i32
    %c0_i32_1 = arith.constant 0 : i32
    return %c0_i32, %c0_i32_0 : i32, i32
  }
  func.func @transform_9(%arg0: i32) -> (i32, i32) {
    %c0_i32 = arith.constant 0 : i32
    %c0_i32_0 = arith.constant 0 : i32
    return %arg0, %c0_i32 : i32, i32
  }
}

</mosaic_0001>

<llo_original>
// kernel: tpu_custom_call.1
$region0: #{tpu_custom_call.1}
  #allocation0 [shape = 'u32[]', space=smem, size = 0x4, offset = 0x4, fixed_abs, tag = 'smem constant byte address 0x4 - core index']
  #allocation1 [shape = 'u32[144,128]{1,0:T(1,128)}', space=vmem, size = 0x12000, scoped, tag = 'internal scratch']
  #allocation2 [shape = 'f32[1,1]{1,0:T(1,128)S(1)}', space=vmem, size = 0x200, scoped, tag = 'scoped memory for tpu_custom_call.1']
  %s0 = inlined_call_operand.vmem [shape: f32[8,24], index: 0, kind: input, shape index: {}]
  %s1 = inlined_call_operand.hbm [shape: f32[8,8], index: 1, kind: input, shape index: {}]
  %s2 = inlined_call_operand.hbm [shape: f32[24,32], index: 2, kind: input, shape index: {}]
  %s3 = inlined_call_operand.hbm [shape: f32[8,32], index: 3, kind: input, shape index: {}]
  %s4 = inlined_call_operand.vmem [shape: f32[1,32], index: 4, kind: input, shape index: {}]
  %s5 = inlined_call_operand.vmem [shape: f32[32,32], index: 5, kind: input, shape index: {}]
  %s6 = inlined_call_operand.vmem [shape: f32[1,32], index: 6, kind: input, shape index: {}]
  %s7 = inlined_call_operand.vmem [shape: f32[32,1], index: 7, kind: input, shape index: {}]
  %s8 = inlined_call_operand.<no memory space> [shape: f32[1,1], index: 8, kind: input, shape index: {}]
  %s9 = inlined_call_operand.vmem [shape: f32[8,1], index: 9, kind: output, shape index: {}]
  %s10 = sld [smem:[#allocation0]]
  $region58: #{tpu_custom_call.1} parent=0
    _
  %s12 = ssub.s32 1, %s10
  %s13 = scalar_select 0, %s12, %s10
  %v14 = vstv %s8
  %15 = vst [vmem:[#allocation2] sm:$0x1] %v14
  $region1: #{tpu_custom_call.1} parent=0
    #allocation3 [shape = 'u8[4096]{0}', space=vmem, size = 0x1000, scoped, tag = 'input window, operand 1, single buffered']
    #allocation4 [shape = 's32[1]{0}', space=sflag, size = 0x4, scoped, tag = 'scoped memory for tpu_custom_call.1']
    #allocation5 [shape = 'u8[12288]{0}', space=vmem, size = 0x3000, scoped, tag = 'input window, operand 2, single buffered']
    #allocation6 [shape = 's32[1]{0}', space=sflag, size = 0x4, scoped, tag = 'scoped memory for tpu_custom_call.1']
    #allocation7 [shape = 'u8[4096]{0}', space=vmem, size = 0x1000, scoped, tag = 'input window, operand 3, single buffered']
    %16 = vsyncpa [#allocation4], 0
    %17 = vsyncpa [#allocation6], 0
    // Predicated region
    $region2: #{tpu_custom_call.1} parent=1 // pred_check
      _
    $region3: #{tpu_custom_call.1} parent=1 // pred_check_branch
      %19 = sbr.rel (0) target = $region5
    $region4: #{tpu_custom_call.1} parent=1 // pred_region
      _
    $region5: #{tpu_custom_call.1} parent=1 // pred_fallthru
      _
    // Predicated region
    $region6: #{tpu_custom_call.1} parent=1 // pred_check
      _
    $region7: #{tpu_custom_call.1} parent=1 // pred_check_branch
      %21 = sbr.rel (0) target = $region9
    $region8: #{tpu_custom_call.1} parent=1 // pred_region
      %s23 = ssub.s32 128, 128
      %24 = vsyncadd [#allocation4], %s23
      %s26 = sshll.u32 [#allocation3], 4
      %s27 = int_to_ptr.vmem [resolvable:$true] %s26
      %29 = dma.hbm_to_vmem [thread:$0]  %s1, 128, %s27, [#allocation4]
    $region9: #{tpu_custom_call.1} parent=1 // pred_fallthru
      _
    // Predicated region
    $region10: #{tpu_custom_call.1} parent=1 // pred_check
      _
    $region11: #{tpu_custom_call.1} parent=1 // pred_check_branch
      %31 = sbr.rel (0) target = $region13
    $region12: #{tpu_custom_call.1} parent=1 // pred_region
      %s33 = ssub.s32 384, 384
      %34 = vsyncadd [#allocation6], %s33
      %s35 = sshll.u32 [#allocation5], 4
      %s36 = int_to_ptr.vmem [resolvable:$true] %s35
      %41 = dma.hbm_to_vmem [thread:$0]  %s2, 384, %s36, [#allocation6], 128, 128, 8
    $region13: #{tpu_custom_call.1} parent=1 // pred_fallthru
      _
    // Predicated region
    $region14: #{tpu_custom_call.1} parent=1 // pred_check
      _
    $region15: #{tpu_custom_call.1} parent=1 // pred_check_branch
      %43 = sbr.rel (0) target = $region17
    $region16: #{tpu_custom_call.1} parent=1 // pred_region
      %s45 = ssub.s32 128, 128
      %46 = vsyncadd [#allocation6], %s45
      %s48 = sshll.u32 [#allocation7], 4
      %s49 = int_to_ptr.vmem [resolvable:$true] %s48
      %51 = dma.hbm_to_vmem [thread:$0]  %s3, 128, %s49, [#allocation6]
    $region17: #{tpu_custom_call.1} parent=1 // pred_fallthru
      _
    // Predicated region
    $region18: #{tpu_custom_call.1} parent=1 // pred_check
      _
    $region19: #{tpu_custom_call.1} parent=1 // pred_check_branch
      %53 = sbr.rel (0) target = $region21
    $region20: #{tpu_custom_call.1} parent=1 // pred_region
      _
    $region21: #{tpu_custom_call.1} parent=1 // pred_fallthru
      _
    // Predicated region
    $region22: #{tpu_custom_call.1} parent=1 // pred_check
      _
    $region23: #{tpu_custom_call.1} parent=1 // pred_check_branch
      %55 = sbr.rel (0) target = $region25
    $region24: #{tpu_custom_call.1} parent=1 // pred_region
      _
    $region25: #{tpu_custom_call.1} parent=1 // pred_fallthru
      _
    // Predicated region
    $region26: #{tpu_custom_call.1} parent=1 // pred_check
      _
    $region27: #{tpu_custom_call.1} parent=1 // pred_check_branch
      %57 = sbr.rel (0) target = $region29
    $region28: #{tpu_custom_call.1} parent=1 // pred_region
      _
    $region29: #{tpu_custom_call.1} parent=1 // pred_fallthru
      _
    // Predicated region
    $region30: #{tpu_custom_call.1} parent=1 // pred_check
      _
    $region31: #{tpu_custom_call.1} parent=1 // pred_check_branch
      %59 = sbr.rel (0) target = $region33
    $region32: #{tpu_custom_call.1} parent=1 // pred_region
      _
    $region33: #{tpu_custom_call.1} parent=1 // pred_fallthru
      _
    // Predicated region
    $region34: #{tpu_custom_call.1} parent=1 // pred_check
      _
    $region35: #{tpu_custom_call.1} parent=1 // pred_check_branch
      %61 = sbr.rel (0) target = $region37
    $region36: #{tpu_custom_call.1} parent=1 // pred_region
      _
    $region37: #{tpu_custom_call.1} parent=1 // pred_fallthru
      _
    // Predicated region
    $region38: #{tpu_custom_call.1} parent=1 // pred_check
      _
    $region39: #{tpu_custom_call.1} parent=1 // pred_check_branch
      %63 = sbr.rel (0) target = $region41
    $region40: #{tpu_custom_call.1} parent=1 // pred_region
      %64 = dma.done [#allocation4], 128
    $region41: #{tpu_custom_call.1} parent=1 // pred_fallthru
      _
    // Predicated region
    $region42: #{tpu_custom_call.1} parent=1 // pred_check
      _
    $region43: #{tpu_custom_call.1} parent=1 // pred_check_branch
      %66 = sbr.rel (0) target = $region45
    $region44: #{tpu_custom_call.1} parent=1 // pred_region
      %67 = dma.done [#allocation6], 384
    $region45: #{tpu_custom_call.1} parent=1 // pred_fallthru
      _
    // Predicated region
    $region46: #{tpu_custom_call.1} parent=1 // pred_check
      _
    $region47: #{tpu_custom_call.1} parent=1 // pred_check_branch
      %69 = sbr.rel (0) target = $region49
    $region48: #{tpu_custom_call.1} parent=1 // pred_region
      %70 = dma.done [#allocation6], 128
    $region49: #{tpu_custom_call.1} parent=1 // pred_fallthru
      _
    %v71 = vld [vmem:[%s0] sm:$0xff]
    %v72 = vld [vmem:[#allocation5] sm:$0xff]
    %v73 = vld [vmem:[#allocation5 + $0x8] sm:$0xff]
    %v74 = vld [vmem:[#allocation5 + $0x10] sm:$0xff]
    %v75 = vld [vmem:[#allocation3] sm:$0xff]
    %v76 = vld [vmem:[#allocation7] sm:$0xff]
    %vm77 = vcmask 64512
    %v79 = vsel %vm77, %v75, 0
    %81 = vmatprep.subr.mxu0 0.0
    %82 = vmatpush1.msra.mxu0 0.0
    %83 = vmatprep.subr.mxu0 0.0
    %84 = vmatpush1.msra.mxu0 0.0
    %85 = vmatprep.subr.mxu0 0.0
    %86 = vmatpush1.msra.mxu0 0.0
    %87 = vmatprep.subr.mxu0 0.0
    %88 = vmatpush1.msra.mxu0 0.0
    %89 = vmatprep.subr.mxu0 0.0
    %90 = vmatpush1.msra.mxu0 0.0
    %91 = vmatprep.subr.mxu0 0.0
    %92 = vmatpush1.msra.mxu0 0.0
    %93 = vmatprep.subr.mxu0 0.0
    %94 = vmatpush1.msra.mxu0 0.0
    %95 = vmatprep.subr.mxu0 0.0
    %96 = vmatpush1.msra.mxu0 0.0
    %97 = vmatprep.subr.mxu0 0.0
    %98 = vmatpush1.msra.mxu0 0.0
    %99 = vmatprep.subr.mxu0 0.0
    %100 = vmatpush1.msra.mxu0 0.0
    %101 = vmatprep.subr.mxu0 0.0
    %102 = vmatpush1.msra.mxu0 0.0
    %103 = vmatprep.subr.mxu0 0.0
    %104 = vmatpush1.msra.mxu0 0.0
    %105 = vmatprep.subr.mxu0 0.0
    %106 = vmatpush1.msra.mxu0 0.0
    %107 = vmatprep.subr.mxu0 0.0
    %108 = vmatpush1.msra.mxu0 0.0
    %109 = vmatprep.subr.mxu0 0.0
    %110 = vmatpush1.msra.mxu0 0.0
    %111 = vmatprep.subr.mxu0 0.0
    %112 = vmatpush1.msra.mxu0 %v76
    %113 = vmatprep.subr.mxu0 0.0
    %114 = vmatpush2.msra.mxu0 0.0
    %115 = vmatprep.subr.mxu0 0.0
    %116 = vmatpush2.msra.mxu0 0.0
    %117 = vmatprep.subr.mxu0 0.0
    %118 = vmatpush2.msra.mxu0 0.0
    %119 = vmatprep.subr.mxu0 0.0
    %120 = vmatpush2.msra.mxu0 0.0
    %121 = vmatprep.subr.mxu0 0.0
    %122 = vmatpush2.msra.mxu0 0.0
    %123 = vmatprep.subr.mxu0 0.0
    %124 = vmatpush2.msra.mxu0 0.0
    %125 = vmatprep.subr.mxu0 0.0
    %126 = vmatpush2.msra.mxu0 0.0
    %127 = vmatprep.subr.mxu0 0.0
    %128 = vmatpush2.msra.mxu0 0.0
    %129 = vmatprep.subr.mxu0 0.0
    %130 = vmatpush2.msra.mxu0 0.0
    %131 = vmatprep.subr.mxu0 0.0
    %132 = vmatpush2.msra.mxu0 0.0
    %133 = vmatprep.subr.mxu0 0.0
    %134 = vmatpush2.msra.mxu0 0.0
    %135 = vmatprep.subr.mxu0 0.0
    %136 = vmatpush2.msra.mxu0 0.0
    %137 = vmatprep.subr.mxu0 0.0
    %138 = vmatpush2.msra.mxu0 0.0
    %139 = vmatprep.subr.mxu0 0.0
    %140 = vmatpush2.msra.mxu0 0.0
    %141 = vmatprep.subr.mxu0 0.0
    %142 = vmatpush2.msra.mxu0 0.0
    %143 = vmatprep.subr.mxu0 0.0
    %144 = vmatpush2.msra.mxu0 0.0
    %145 = vmatprep.mubr.f32.mxu0 0.0
    %146 = vmatmul.mubr.f32.gmra.mxu0 %v79
    %v147 = vpop.f32.mrf.mxu0
    %v148 = vadd.f32 0.0, %v147
    %v149 = vpop.f32.mrf.mxu0
    %150 = vdwg.mxu0
    %vm151 = vcmask 195584
    %v153 = vsel %vm151, %v71, 0
    %155 = vmatprep.subr.mxu0 0.0
    %156 = vmatpush1.msra.mxu0 0.0
    %157 = vmatprep.subr.mxu0 0.0
    %158 = vmatpush1.msra.mxu0 0.0
    %159 = vmatprep.subr.mxu0 0.0
    %160 = vmatpush1.msra.mxu0 0.0
    %161 = vmatprep.subr.mxu0 0.0
    %162 = vmatpush1.msra.mxu0 0.0
    %163 = vmatprep.subr.mxu0 0.0
    %164 = vmatpush1.msra.mxu0 0.0
    %165 = vmatprep.subr.mxu0 0.0
    %166 = vmatpush1.msra.mxu0 0.0
    %167 = vmatprep.subr.mxu0 0.0
    %168 = vmatpush1.msra.mxu0 0.0
    %169 = vmatprep.subr.mxu0 0.0
    %170 = vmatpush1.msra.mxu0 0.0
    %171 = vmatprep.subr.mxu0 0.0
    %172 = vmatpush1.msra.mxu0 0.0
    %173 = vmatprep.subr.mxu0 0.0
    %174 = vmatpush1.msra.mxu0 0.0
    %175 = vmatprep.subr.mxu0 0.0
    %176 = vmatpush1.msra.mxu0 0.0
    %177 = vmatprep.subr.mxu0 0.0
    %178 = vmatpush1.msra.mxu0 0.0
    %179 = vmatprep.subr.mxu0 0.0
    %180 = vmatpush1.msra.mxu0 0.0
    %181 = vmatprep.subr.mxu0 0.0
    %182 = vmatpush1.msra.mxu0 %v74
    %183 = vmatprep.subr.mxu0 0.0
    %184 = vmatpush1.msra.mxu0 %v73
    %185 = vmatprep.subr.mxu0 0.0
    %186 = vmatpush1.msra.mxu0 %v72
    %187 = vmatprep.subr.mxu0 0.0
    %188 = vmatpush2.msra.mxu0 0.0
    %189 = vmatprep.subr.mxu0 0.0
    %190 = vmatpush2.msra.mxu0 0.0
    %191 = vmatprep.subr.mxu0 0.0
    %192 = vmatpush2.msra.mxu0 0.0
    %193 = vmatprep.subr.mxu0 0.0
    %194 = vmatpush2.msra.mxu0 0.0
    %195 = vmatprep.subr.mxu0 0.0
    %196 = vmatpush2.msra.mxu0 0.0
    %197 = vmatprep.subr.mxu0 0.0
    %198 = vmatpush2.msra.mxu0 0.0
    %199 = vmatprep.subr.mxu0 0.0
    %200 = vmatpush2.msra.mxu0 0.0
    %201 = vmatprep.subr.mxu0 0.0
    %202 = vmatpush2.msra.mxu0 0.0
    %203 = vmatprep.subr.mxu0 0.0
    %204 = vmatpush2.msra.mxu0 0.0
    %205 = vmatprep.subr.mxu0 0.0
    %206 = vmatpush2.msra.mxu0 0.0
    %207 = vmatprep.subr.mxu0 0.0
    %208 = vmatpush2.msra.mxu0 0.0
    %209 = vmatprep.subr.mxu0 0.0
    %210 = vmatpush2.msra.mxu0 0.0
    %211 = vmatprep.subr.mxu0 0.0
    %212 = vmatpush2.msra.mxu0 0.0
    %213 = vmatprep.subr.mxu0 0.0
    %214 = vmatpush2.msra.mxu0 0.0
    %215 = vmatprep.subr.mxu0 0.0
    %216 = vmatpush2.msra.mxu0 0.0
    %217 = vmatprep.subr.mxu0 0.0
    %218 = vmatpush2.msra.mxu0 0.0
    %219 = vmatprep.mubr.f32.mxu0 0.0
    %220 = vmatmul.mubr.f32.gmra.mxu0 %v153
    %v221 = vpop.f32.mrf.mxu0
    %v222 = vadd.f32 %v148, %v221
    %v223 = vpop.f32.mrf.mxu0
    %224 = vdwg.mxu0
    %v225 = vld [vmem:[%s4] sm:$0x1]
    %v227 = vlaneseq
    %v228 = vshrl.u32 %v227, 7
    %v229 = vsub.s32 0, %v228
    %v230 = vrot.slane %v225, %v229
    %v232 = vadd.f32 %v222, %v230
    %v233 = vmax.f32 %v232, 0.0
    %v234 = vld [vmem:[%s5] sm:$0xff]
    %v235 = vld [vmem:[%s5 + $0x8] sm:$0xff]
    %v236 = vld [vmem:[%s5 + $0x10] sm:$0xff]
    %v237 = vld [vmem:[%s5 + $0x18] sm:$0xff]
    %v238 = vld [vmem:[%s6] sm:$0x1]
    %v240 = vlaneseq
    %v241 = vshrl.u32 %v240, 7
    %v242 = vsub.s32 0, %v241
    %v243 = vrot.slane %v238, %v242
    %vm245 = vcmask 261120
    %v247 = vsel %vm245, %v233, 0
    %249 = vmatprep.subr.mxu0 0.0
    %250 = vmatpush1.msra.mxu0 0.0
    %251 = vmatprep.subr.mxu0 0.0
    %252 = vmatpush1.msra.mxu0 0.0
    %253 = vmatprep.subr.mxu0 0.0
    %254 = vmatpush1.msra.mxu0 0.0
    %255 = vmatprep.subr.mxu0 0.0
    %256 = vmatpush1.msra.mxu0 0.0
    %257 = vmatprep.subr.mxu0 0.0
    %258 = vmatpush1.msra.mxu0 0.0
    %259 = vmatprep.subr.mxu0 0.0
    %260 = vmatpush1.msra.mxu0 0.0
    %261 = vmatprep.subr.mxu0 0.0
    %262 = vmatpush1.msra.mxu0 0.0
    %263 = vmatprep.subr.mxu0 0.0
    %264 = vmatpush1.msra.mxu0 0.0
    %265 = vmatprep.subr.mxu0 0.0
    %266 = vmatpush1.msra.mxu0 0.0
    %267 = vmatprep.subr.mxu0 0.0
    %268 = vmatpush1.msra.mxu0 0.0
    %269 = vmatprep.subr.mxu0 0.0
    %270 = vmatpush1.msra.mxu0 0.0
    %271 = vmatprep.subr.mxu0 0.0
    %272 = vmatpush1.msra.mxu0 0.0
    %273 = vmatprep.subr.mxu0 0.0
    %274 = vmatpush1.msra.mxu0 %v237
    %275 = vmatprep.subr.mxu0 0.0
    %276 = vmatpush1.msra.mxu0 %v236
    %277 = vmatprep.subr.mxu0 0.0
    %278 = vmatpush1.msra.mxu0 %v235
    %279 = vmatprep.subr.mxu0 0.0
    %280 = vmatpush1.msra.mxu0 %v234
    %281 = vmatprep.subr.mxu0 0.0
    %282 = vmatpush2.msra.mxu0 0.0
    %283 = vmatprep.subr.mxu0 0.0
    %284 = vmatpush2.msra.mxu0 0.0
    %285 = vmatprep.subr.mxu0 0.0
    %286 = vmatpush2.msra.mxu0 0.0
    %287 = vmatprep.subr.mxu0 0.0
    %288 = vmatpush2.msra.mxu0 0.0
    %289 = vmatprep.subr.mxu0 0.0
    %290 = vmatpush2.msra.mxu0 0.0
    %291 = vmatprep.subr.mxu0 0.0
    %292 = vmatpush2.msra.mxu0 0.0
    %293 = vmatprep.subr.mxu0 0.0
    %294 = vmatpush2.msra.mxu0 0.0
    %295 = vmatprep.subr.mxu0 0.0
    %296 = vmatpush2.msra.mxu0 0.0
    %297 = vmatprep.subr.mxu0 0.0
    %298 = vmatpush2.msra.mxu0 0.0
    %299 = vmatprep.subr.mxu0 0.0
    %300 = vmatpush2.msra.mxu0 0.0
    %301 = vmatprep.subr.mxu0 0.0
    %302 = vmatpush2.msra.mxu0 0.0
    %303 = vmatprep.subr.mxu0 0.0
    %304 = vmatpush2.msra.mxu0 0.0
    %305 = vmatprep.subr.mxu0 0.0
    %306 = vmatpush2.msra.mxu0 0.0
    %307 = vmatprep.subr.mxu0 0.0
    %308 = vmatpush2.msra.mxu0 0.0
    %309 = vmatprep.subr.mxu0 0.0
    %310 = vmatpush2.msra.mxu0 0.0
    %311 = vmatprep.subr.mxu0 0.0
    %312 = vmatpush2.msra.mxu0 0.0
    %313 = vmatprep.mubr.f32.mxu0 0.0
    %314 = vmatmul.mubr.f32.gmra.mxu0 %v247
    %v315 = vpop.f32.mrf.mxu0
    %v316 = vadd.f32 %v243, %v315
    %v317 = vpop.f32.mrf.mxu0
    %318 = vdwg.mxu0
    %v319 = vmax.f32 %v316, 0.0
    %v320 = vld [vmem:[%s7] sm:$0xff]
    %v321 = vld [vmem:[%s7 + $0x8] sm:$0xff]
    %v322 = vld [vmem:[%s7 + $0x10] sm:$0xff]
    %v323 = vld [vmem:[%s7 + $0x18] sm:$0xff]
    %v324 = vld [vmem:[#allocation2] sm:$0x1]
    %v326 = vlaneseq
    %v327 = vshrl.u32 %v326, 7
    %v328 = vsub.s32 0, %v327
    %v329 = vrot.slane %v324, %v328
    %v332 = vsel %vm245, %v319, 0
    %334 = vmatprep.subr.mxu0 0.0
    %335 = vmatpush1.msra.mxu0 0.0
    %336 = vmatprep.subr.mxu0 0.0
    %337 = vmatpush1.msra.mxu0 0.0
    %338 = vmatprep.subr.mxu0 0.0
    %339 = vmatpush1.msra.mxu0 0.0
    %340 = vmatprep.subr.mxu0 0.0
    %341 = vmatpush1.msra.mxu0 0.0
    %342 = vmatprep.subr.mxu0 0.0
    %343 = vmatpush1.msra.mxu0 0.0
    %344 = vmatprep.subr.mxu0 0.0
    %345 = vmatpush1.msra.mxu0 0.0
    %346 = vmatprep.subr.mxu0 0.0
    %347 = vmatpush1.msra.mxu0 0.0
    %348 = vmatprep.subr.mxu0 0.0
    %349 = vmatpush1.msra.mxu0 0.0
    %350 = vmatprep.subr.mxu0 0.0
    %351 = vmatpush1.msra.mxu0 0.0
    %352 = vmatprep.subr.mxu0 0.0
    %353 = vmatpush1.msra.mxu0 0.0
    %354 = vmatprep.subr.mxu0 0.0
    %355 = vmatpush1.msra.mxu0 0.0
    %356 = vmatprep.subr.mxu0 0.0
    %357 = vmatpush1.msra.mxu0 0.0
    %358 = vmatprep.subr.mxu0 0.0
    %359 = vmatpush1.msra.mxu0 %v323
    %360 = vmatprep.subr.mxu0 0.0
    %361 = vmatpush1.msra.mxu0 %v322
    %362 = vmatprep.subr.mxu0 0.0
    %363 = vmatpush1.msra.mxu0 %v321
    %364 = vmatprep.subr.mxu0 0.0
    %365 = vmatpush1.msra.mxu0 %v320
    %366 = vmatprep.subr.mxu0 0.0
    %367 = vmatpush2.msra.mxu0 0.0
    %368 = vmatprep.subr.mxu0 0.0
    %369 = vmatpush2.msra.mxu0 0.0
    %370 = vmatprep.subr.mxu0 0.0
    %371 = vmatpush2.msra.mxu0 0.0
    %372 = vmatprep.subr.mxu0 0.0
    %373 = vmatpush2.msra.mxu0 0.0
    %374 = vmatprep.subr.mxu0 0.0
    %375 = vmatpush2.msra.mxu0 0.0
    %376 = vmatprep.subr.mxu0 0.0
    %377 = vmatpush2.msra.mxu0 0.0
    %378 = vmatprep.subr.mxu0 0.0
    %379 = vmatpush2.msra.mxu0 0.0
    %380 = vmatprep.subr.mxu0 0.0
    %381 = vmatpush2.msra.mxu0 0.0
    %382 = vmatprep.subr.mxu0 0.0
    %383 = vmatpush2.msra.mxu0 0.0
    %384 = vmatprep.subr.mxu0 0.0
    %385 = vmatpush2.msra.mxu0 0.0
    %386 = vmatprep.subr.mxu0 0.0
    %387 = vmatpush2.msra.mxu0 0.0
    %388 = vmatprep.subr.mxu0 0.0
    %389 = vmatpush2.msra.mxu0 0.0
    %390 = vmatprep.subr.mxu0 0.0
    %391 = vmatpush2.msra.mxu0 0.0
    %392 = vmatprep.subr.mxu0 0.0
    %393 = vmatpush2.msra.mxu0 0.0
    %394 = vmatprep.subr.mxu0 0.0
    %395 = vmatpush2.msra.mxu0 0.0
    %396 = vmatprep.subr.mxu0 0.0
    %397 = vmatpush2.msra.mxu0 0.0
    %398 = vmatprep.mubr.f32.mxu0 0.0
    %399 = vmatmul.mubr.f32.gmra.mxu0 %v332
    %v400 = vpop.f32.mrf.mxu0
    %v401 = vadd.f32 %v329, %v400
    %v402 = vpop.f32.mrf.mxu0
    %403 = vdwg.mxu0
    %vm404 = vcmask 7168
    %405 = vst.msk [vmem:[%s9] sm:$0xff] %vm404, %v401
    // Predicated region
    $region50: #{tpu_custom_call.1} parent=1 // pred_check
      _
    $region51: #{tpu_custom_call.1} parent=1 // pred_check_branch
      %407 = sbr.rel (0) target = $region53
    $region52: #{tpu_custom_call.1} parent=1 // pred_region
      _
    $region53: #{tpu_custom_call.1} parent=1 // pred_fallthru
      _
    // Predicated region
    $region54: #{tpu_custom_call.1} parent=1 // pred_check
      _
    $region55: #{tpu_custom_call.1} parent=1 // pred_check_branch
      %409 = sbr.rel (0) target = $region57
    $region56: #{tpu_custom_call.1} parent=1 // pred_region
      _
    $region57: #{tpu_custom_call.1} parent=1 // pred_fallthru
      _
    %410 = vsyncpa [#allocation4], 1
    %411 = vsyncpa [#allocation6], 1

</llo_original>
